<compile_context>
chip_gen: v7x
topology: tpu7x:2x2x1
jax: 0.10.0
libtpu: 0.0.40
codegen_flags: <defaults>
</compile_context>

<pallas_src>
import jax
import jax.numpy as jnp
from jax.experimental import pallas as pl
from jax.experimental.pallas import tpu as pltpu


def _make_topnet_kernel(num_layers, hidden, out_dim, out_pad, n_real, n_pad,
                        nelx, nely, sym_x_axis, sym_y_axis,
                        use_bf16_matmul=True, eps=1e-5):
    """Builds the kernel body for a fixed layer count / config."""
    needs_mask = n_pad != n_real
    inv_n = 1.0 / float(n_real)
    act_dtype = jnp.bfloat16 if use_bf16_matmul else jnp.float32
    H = hidden

    def kernel(x_ref, p_ref, out_ref):
        x = x_ref[...]                               # (2, Npad) f32
        p = p_ref[...]                               # (rows, H+1) f32, packed params

        x0 = x[0:1, :]                               # sublane selects (no lane slicing)
        x1 = x[1:2, :]

        # symmetry reflection of the coordinates (torch.abs branches)
        if sym_y_axis:
            xv = 0.5 * nelx + jnp.abs(x0 - 0.5 * nelx)
        else:
            xv = x0
        if sym_x_axis:
            yv = 0.5 * nely + jnp.abs(x1 - 0.5 * nely)
        else:
            yv = x1

        if needs_mask:
            lane = jax.lax.broadcasted_iota(jnp.int32, (1, n_pad), 1)
            valid = (lane < n_real).astype(jnp.float32)   # (1, Npad)

        def bn_relu6(z):
            # BatchNorm1d (training mode, biased variance, gamma=1 / beta=0)
            # fused single pass, then scale/shift FMA + ReLU6.
            zm = z * valid if needs_mask else z
            mean = jnp.sum(zm, axis=1, keepdims=True) * inv_n              # (H,1)
            var = jnp.maximum(
                jnp.sum(zm * zm, axis=1, keepdims=True) * inv_n - mean * mean,
                0.0)                                                       # clamp cancellation
            scale = jax.lax.rsqrt(var + eps)                               # (H,1)
            shift = -mean * scale
            h = jnp.clip(z * scale + shift, 0.0, 6.0)                      # ReLU6
            return h.astype(act_dtype)

        # ---- layer 0: Linear(2, H) as two broadcast FMAs on the VPU ----
        w0x = p[0:H, 0:1]                            # (H, 1)
        w0y = p[0:H, 1:2]                            # (H, 1)
        b0 = p[0:H, H:H + 1]                         # (H, 1)
        h = bn_relu6(w0x * xv + w0y * yv + b0)       # (H, Npad)

        # ---- hidden layers on the MXU: z = W @ h + b ----
        for lyr in range(1, num_layers):
            r0 = lyr * H
            w = p[r0:r0 + H, 0:H]                    # (H, H)
            b = p[r0:r0 + H, H:H + 1]                # (H, 1)
            if use_bf16_matmul:
                w = w.astype(jnp.bfloat16)
            z = jnp.dot(w, h, preferred_element_type=jnp.float32) + b
            h = bn_relu6(z)

        # ---- output layer + softmax over channels (sublane axis) + 0.0001 ----
        r0 = num_layers * H
        w_out = p[r0:r0 + out_pad, 0:H]              # (out_pad, H); pad rows are 0
        b_out = p[r0:r0 + out_pad, H:H + 1]          # (out_pad, 1); pad rows -1e30
        if use_bf16_matmul:
            w_out = w_out.astype(jnp.bfloat16)
        logits = jnp.dot(w_out, h, preferred_element_type=jnp.float32) + b_out

        mx = jnp.max(logits, axis=0, keepdims=True)  # (1, Npad)
        e = jnp.exp(logits - mx)                     # pad rows -> exp(-huge) = 0
        s = jnp.sum(e, axis=0, keepdims=True)
        out_ref[...] = 1e-4 + e * pl.reciprocal(s, approx=True)

    return kernel


def _vmem_cap_bytes():
    """Generation-aware VMEM ceiling (~85% of physical), safe fallback 48 MiB."""
    try:
        cap = getattr(pltpu.get_tpu_info(), "vmem_capacity_bytes", None)
        if cap:
            return int(cap * 0.85)
    except Exception:
        pass
    return 48 << 20


def topnet_forward(x, weights, biases, *, nelx, nely, sym_x_axis, sym_y_axis,
                   fixed_idx=None, use_bf16_matmul=True):
    """weights[i]: PyTorch layer.weight, shape (out_i, in_i); biases[i]: (out_i,).
    Last entry of each list is the output layer."""
    num_layers = len(weights) - 1
    n_real = x.shape[0]
    hidden = weights[0].shape[0]
    out_dim = weights[-1].shape[0]
    out_pad = max(8, ((out_dim + 7) // 8) * 8)
    H = hidden

    # lane-dense padding: N on the lane axis, rounded up to a multiple of 128
    n_pad = max(128, ((n_real + 127) // 128) * 128)
    xt = jnp.transpose(x.astype(jnp.float32))        # (2, N)
    if n_pad != n_real:
        xt = jnp.pad(xt, ((0, 0), (0, n_pad - n_real)))

    # pack all parameters into one (rows, H+1) buffer -> a single DMA.
    #   rows [l*H:(l+1)*H): layer l weights in cols [0:in_l), bias in col H
    #   rows [L*H:L*H+out_pad): output layer; padded rows have bias -1e30
    p_rows = num_layers * H + out_pad
    p_cols = H + 1
    params = jnp.zeros((p_rows, p_cols), jnp.float32)
    params = params.at[0:H, 0:2].set(weights[0].astype(jnp.float32))
    params = params.at[0:H, H].set(biases[0].astype(jnp.float32))
    for lyr in range(1, num_layers):
        r0 = lyr * H
        params = params.at[r0:r0 + H, 0:H].set(weights[lyr].astype(jnp.float32))
        params = params.at[r0:r0 + H, H].set(biases[lyr].astype(jnp.float32))
    r0 = num_layers * H
    params = params.at[r0:r0 + out_dim, 0:H].set(weights[-1].astype(jnp.float32))
    params = params.at[r0:r0 + out_dim, H].set(biases[-1].astype(jnp.float32))
    if out_pad > out_dim:
        params = params.at[r0 + out_dim:r0 + out_pad, H].set(-1e30)

    # explicit VMEM budget: inputs/output (x2 headroom) + a few live activations
    act_bytes = 2 if use_bf16_matmul else 4
    needed = (2 * (xt.size * 4 + params.size * 4 + out_pad * n_pad * 4)
              + 4 * H * n_pad * act_bytes          # resident h buffers
              + 2 * H * n_pad * 4)                 # f32 z / zm temporaries
    vmem_limit = int(min(max(needed, 8 << 20), _vmem_cap_bytes()))

    kernel = _make_topnet_kernel(num_layers, H, out_dim, out_pad, n_real, n_pad,
                                 nelx, nely, sym_x_axis, sym_y_axis,
                                 use_bf16_matmul=use_bf16_matmul)

    vmem = pl.BlockSpec(memory_space=pltpu.MemorySpace.VMEM)
    out_t = pl.pallas_call(
        kernel,
        out_shape=jax.ShapeDtypeStruct((out_pad, n_pad), jnp.float32),
        in_specs=[vmem, vmem],
        out_specs=vmem,
        compiler_params=pltpu.CompilerParams(vmem_limit_bytes=vmem_limit),
    )(xt, params)

    out = jnp.transpose(out_t)[:n_real, :out_dim]    # (N, out_dim)

    # fixedIdx in-place scatter from the torch module, applied as JAX glue
    # (data-dependent scatter; kept outside the kernel).
    if fixed_idx is not None:
        out = out.at[fixed_idx, 0].set(0.95)
        out = out.at[fixed_idx, 1:].set(0.01)
    return out


def topnet_reference(x, weights, biases, *, nelx, nely, sym_x_axis, sym_y_axis,
                     eps=1e-5):
    """Pure-JAX f32 reference (mirrors the torch forward, fixedIdx=None path)."""
    x = x.astype(jnp.float32)
    x0, x1 = x[:, 0], x[:, 1]
    xv = 0.5 * nelx + jnp.abs(x0 - 0.5 * nelx) if sym_y_axis else x0
    yv = 0.5 * nely + jnp.abs(x1 - 0.5 * nely) if sym_x_axis else x1
    h = jnp.stack([xv, yv], axis=1)
    for w, b in zip(weights[:-1], biases[:-1]):
        z = h @ w.T + b
        mean = jnp.mean(z, axis=0, keepdims=True)
        var = jnp.mean((z - mean) ** 2, axis=0, keepdims=True)
        z = (z - mean) / jnp.sqrt(var + eps)
        h = jnp.clip(z, 0.0, 6.0)
    logits = h @ weights[-1].T + biases[-1]
    return 1e-4 + jax.nn.softmax(logits, axis=1)


def init_params(key, num_layers, neurons_per_layer, output_dim, input_dim=2):
    """Deterministic synthetic init: xavier-uniform hidden weights, zero hidden
    biases (matches the module's explicit init); uniform(-1/sqrt(fan_in)) for
    the final layer.  Weights are in PyTorch (out, in) layout."""
    weights, biases = [], []
    current_dim = input_dim
    for _ in range(num_layers):
        key, kw = jax.random.split(key)
        bound = (6.0 / (current_dim + neurons_per_layer)) ** 0.5
        w = jax.random.uniform(kw, (neurons_per_layer, current_dim),
                               jnp.float32, -bound, bound)
        b = jnp.zeros((neurons_per_layer,), jnp.float32)
        weights.append(w)
        biases.append(b)
        current_dim = neurons_per_layer
    key, kw, kb = jax.random.split(key, 3)
    bound = 1.0 / (current_dim ** 0.5)
    w = jax.random.uniform(kw, (output_dim, current_dim),
                           jnp.float32, -bound, bound)
    b = jax.random.uniform(kb, (output_dim,), jnp.float32, -bound, bound)
    weights.append(w)
    biases.append(b)
    return weights, biases


def _make_coords(key, nelx, nely):
    xs = (jnp.arange(nelx, dtype=jnp.float32) + 0.5)
    ys = (jnp.arange(nely, dtype=jnp.float32) + 0.5)
    gx, gy = jnp.meshgrid(xs, ys, indexing="ij")
    coords = jnp.stack([gx.reshape(-1), gy.reshape(-1)], axis=1)
    return coords + 0.01 * jax.random.normal(key, coords.shape, jnp.float32)


if __name__ == "__main__":
    # Small config consistent with the module: 2-D input coords, a few hidden
    # layers, numMaterials + 1 output channels, N = nelx * nely points.
    num_layers = 2
    neurons_per_layer = 32
    nelx, nely = 16, 16               # N = 256 -> multiple of 128 (no mask path)
    num_materials = 3
    output_dim = num_materials + 1
    sym_x_axis, sym_y_axis = True, False

    key = jax.random.PRNGKey(0)
    key, kx = jax.random.split(key)
    coords = _make_coords(kx, nelx, nely)                       # (256, 2)
    weights, biases = init_params(key, num_layers, neurons_per_layer, output_dim)

    ref = topnet_reference(coords, weights, biases,
                           nelx=nelx, nely=nely,
                           sym_x_axis=sym_x_axis, sym_y_axis=sym_y_axis)

    # (1) default fast path: bf16 MXU matmuls + bf16 activations.
    out = topnet_forward(coords, weights, biases,
                         nelx=nelx, nely=nely,
                         sym_x_axis=sym_x_axis, sym_y_axis=sym_y_axis,
                         use_bf16_matmul=True)
    out = jax.block_until_ready(out)
    n_pts = nelx * nely
    assert out.shape == (n_pts, output_dim)
    assert bool(jnp.all(jnp.isfinite(out)))
    row_sums = jnp.sum(out, axis=1)
    assert bool(jnp.all(jnp.abs(row_sums - (1.0 + 1e-4 * output_dim)) < 5e-3))
    assert bool(jnp.max(jnp.abs(out - ref)) < 3e-2)   # bf16 weights/activations

    # (2) f32 path: tight match to the torch-equivalent reference.
    out_f32 = topnet_forward(coords, weights, biases,
                             nelx=nelx, nely=nely,
                             sym_x_axis=sym_x_axis, sym_y_axis=sym_y_axis,
                             use_bf16_matmul=False)
    out_f32 = jax.block_until_ready(out_f32)
    assert bool(jnp.max(jnp.abs(out_f32 - ref)) < 5e-3)

    # (3) non-multiple-of-128 N exercises the masked BatchNorm path.
    nelx2, nely2 = 10, 10                                       # N = 100
    key, kx2 = jax.random.split(key)
    coords2 = _make_coords(kx2, nelx2, nely2)
    ref2 = topnet_reference(coords2, weights, biases,
                            nelx=nelx2, nely=nely2,
                            sym_x_axis=sym_x_axis, sym_y_axis=sym_y_axis)
    out2 = topnet_forward(coords2, weights, biases,
                          nelx=nelx2, nely=nely2,
                          sym_x_axis=sym_x_axis, sym_y_axis=sym_y_axis,
                          use_bf16_matmul=False)
    out2 = jax.block_until_ready(out2)
    assert out2.shape == (nelx2 * nely2, output_dim)
    assert bool(jnp.max(jnp.abs(out2 - ref2)) < 5e-3)

    # (4) fixedIdx scatter path (JAX glue outside the kernel).
    fixed_idx = jnp.array([0, 5, 17], dtype=jnp.int32)
    out_fix = topnet_forward(coords, weights, biases,
                             nelx=nelx, nely=nely,
                             sym_x_axis=sym_x_axis, sym_y_axis=sym_y_axis,
                             fixed_idx=fixed_idx)
    out_fix = jax.block_until_ready(out_fix)
    assert bool(jnp.all(out_fix[fixed_idx, 0] == 0.95))
    assert bool(jnp.all(out_fix[fixed_idx, 1:] == 0.01))

    print("KERNEL_OK")
</pallas_src>

<mosaic_0001>
module attributes {stable_mosaic.version = 11 : i64} {
  func.func @kernel(%arg0: memref<2x256xf32, #tpu.memory_space<vmem>>, %arg1: memref<72x33xf32, #tpu.memory_space<vmem>>, %arg2: memref<8x256xf32, #tpu.memory_space<vmem>>) attributes {dimension_semantics = [], scalar_prefetch = 0 : i64, scratch_operands = 0 : i64, tpu.core_type = #tpu.core_type<tc>} {
    %c0 = arith.constant 0 : index
    %c0_0 = arith.constant 0 : index
    %0 = vector.load %arg0[%c0, %c0_0] : memref<2x256xf32, #tpu.memory_space<vmem>>, vector<2x256xf32>
    %c0_1 = arith.constant 0 : index
    %c0_2 = arith.constant 0 : index
    %1 = vector.load %arg1[%c0_1, %c0_2] : memref<72x33xf32, #tpu.memory_space<vmem>>, vector<72x33xf32>
    %2 = vector.extract_strided_slice %0 {offsets = [0, 0], sizes = [1, 256], strides = [1, 1]} : vector<2x256xf32> to vector<1x256xf32>
    %3 = vector.extract_strided_slice %0 {offsets = [1, 0], sizes = [1, 256], strides = [1, 1]} : vector<2x256xf32> to vector<1x256xf32>
    %cst = arith.constant 8.000000e+00 : f32
    %4 = vector.broadcast %cst : f32 to vector<1x256xf32>
    %5 = arith.subf %3, %4 : vector<1x256xf32>
    %6 = math.absf %5 : vector<1x256xf32>
    %cst_3 = arith.constant 8.000000e+00 : f32
    %7 = vector.broadcast %cst_3 : f32 to vector<1x256xf32>
    %8 = arith.addf %7, %6 : vector<1x256xf32>
    %9 = vector.extract_strided_slice %1 {offsets = [0, 0], sizes = [32, 1], strides = [1, 1]} : vector<72x33xf32> to vector<32x1xf32>
    %10 = vector.extract_strided_slice %1 {offsets = [0, 1], sizes = [32, 1], strides = [1, 1]} : vector<72x33xf32> to vector<32x1xf32>
    %11 = vector.extract_strided_slice %1 {offsets = [0, 32], sizes = [32, 1], strides = [1, 1]} : vector<72x33xf32> to vector<32x1xf32>
    %12 = vector.broadcast %9 : vector<32x1xf32> to vector<32x256xf32>
    %13 = vector.broadcast %2 : vector<1x256xf32> to vector<32x256xf32>
    %14 = arith.mulf %12, %13 : vector<32x256xf32>
    %15 = vector.broadcast %10 : vector<32x1xf32> to vector<32x256xf32>
    %16 = vector.broadcast %8 : vector<1x256xf32> to vector<32x256xf32>
    %17 = arith.mulf %15, %16 : vector<32x256xf32>
    %18 = arith.addf %14, %17 : vector<32x256xf32>
    %19 = vector.broadcast %11 : vector<32x1xf32> to vector<32x256xf32>
    %20 = arith.addf %18, %19 : vector<32x256xf32>
    %cst_4 = arith.constant dense<0.000000e+00> : vector<32xf32>
    %21 = vector.multi_reduction <add>, %20, %cst_4 [1] : vector<32x256xf32> to vector<32xf32>
    %22 = vector.shape_cast %21 : vector<32xf32> to vector<32x1xf32>
    %cst_5 = arith.constant 3.906250e-03 : f32
    %23 = vector.broadcast %cst_5 : f32 to vector<32x1xf32>
    %24 = arith.mulf %22, %23 : vector<32x1xf32>
    %25 = arith.mulf %20, %20 : vector<32x256xf32>
    %cst_6 = arith.constant dense<0.000000e+00> : vector<32xf32>
    %26 = vector.multi_reduction <add>, %25, %cst_6 [1] : vector<32x256xf32> to vector<32xf32>
    %27 = vector.shape_cast %26 : vector<32xf32> to vector<32x1xf32>
    %cst_7 = arith.constant 3.906250e-03 : f32
    %28 = vector.broadcast %cst_7 : f32 to vector<32x1xf32>
    %29 = arith.mulf %27, %28 : vector<32x1xf32>
    %30 = arith.mulf %24, %24 : vector<32x1xf32>
    %31 = arith.subf %29, %30 : vector<32x1xf32>
    %cst_8 = arith.constant 0.000000e+00 : f32
    %32 = vector.broadcast %cst_8 : f32 to vector<32x1xf32>
    %33 = arith.maximumf %31, %32 : vector<32x1xf32>
    %cst_9 = arith.constant 9.99999974E-6 : f32
    %34 = vector.broadcast %cst_9 : f32 to vector<32x1xf32>
    %35 = arith.addf %33, %34 : vector<32x1xf32>
    %36 = math.rsqrt %35 : vector<32x1xf32>
    %cst_10 = arith.constant 0.000000e+00 : f32
    %37 = vector.broadcast %cst_10 : f32 to vector<32x1xf32>
    %38 = arith.subf %37, %24 : vector<32x1xf32>
    %39 = arith.mulf %38, %36 : vector<32x1xf32>
    %40 = vector.broadcast %36 : vector<32x1xf32> to vector<32x256xf32>
    %41 = arith.mulf %20, %40 : vector<32x256xf32>
    %42 = vector.broadcast %39 : vector<32x1xf32> to vector<32x256xf32>
    %43 = arith.addf %41, %42 : vector<32x256xf32>
    %cst_11 = arith.constant 0.000000e+00 : f32
    %cst_12 = arith.constant 6.000000e+00 : f32
    %44 = vector.broadcast %cst_11 : f32 to vector<32x256xf32>
    %45 = arith.maximumf %44, %43 : vector<32x256xf32>
    %46 = vector.broadcast %cst_12 : f32 to vector<32x256xf32>
    %47 = arith.minimumf %46, %45 : vector<32x256xf32>
    %48 = arith.truncf %47 : vector<32x256xf32> to vector<32x256xbf16>
    %49 = vector.extract_strided_slice %1 {offsets = [32, 0], sizes = [32, 32], strides = [1, 1]} : vector<72x33xf32> to vector<32x32xf32>
    %50 = vector.extract_strided_slice %1 {offsets = [32, 32], sizes = [32, 1], strides = [1, 1]} : vector<72x33xf32> to vector<32x1xf32>
    %51 = arith.truncf %49 : vector<32x32xf32> to vector<32x32xbf16>
    %cst_13 = arith.constant dense<0.000000e+00> : vector<32x256xf32>
    %52 = tpu.matmul %51, %48, %cst_13 {dimension_numbers = #tpu.dot_dimension_numbers<[1], [0], [0], [1], [0, 0, 1, 1], [], []>} : vector<32x32xbf16>, vector<32x256xbf16>, vector<32x256xf32> -> vector<32x256xf32>
    %53 = vector.broadcast %50 : vector<32x1xf32> to vector<32x256xf32>
    %54 = arith.addf %52, %53 : vector<32x256xf32>
    %cst_14 = arith.constant dense<0.000000e+00> : vector<32xf32>
    %55 = vector.multi_reduction <add>, %54, %cst_14 [1] : vector<32x256xf32> to vector<32xf32>
    %56 = vector.shape_cast %55 : vector<32xf32> to vector<32x1xf32>
    %cst_15 = arith.constant 3.906250e-03 : f32
    %57 = vector.broadcast %cst_15 : f32 to vector<32x1xf32>
    %58 = arith.mulf %56, %57 : vector<32x1xf32>
    %59 = arith.mulf %54, %54 : vector<32x256xf32>
    %cst_16 = arith.constant dense<0.000000e+00> : vector<32xf32>
    %60 = vector.multi_reduction <add>, %59, %cst_16 [1] : vector<32x256xf32> to vector<32xf32>
    %61 = vector.shape_cast %60 : vector<32xf32> to vector<32x1xf32>
    %cst_17 = arith.constant 3.906250e-03 : f32
    %62 = vector.broadcast %cst_17 : f32 to vector<32x1xf32>
    %63 = arith.mulf %61, %62 : vector<32x1xf32>
    %64 = arith.mulf %58, %58 : vector<32x1xf32>
    %65 = arith.subf %63, %64 : vector<32x1xf32>
    %cst_18 = arith.constant 0.000000e+00 : f32
    %66 = vector.broadcast %cst_18 : f32 to vector<32x1xf32>
    %67 = arith.maximumf %65, %66 : vector<32x1xf32>
    %cst_19 = arith.constant 9.99999974E-6 : f32
    %68 = vector.broadcast %cst_19 : f32 to vector<32x1xf32>
    %69 = arith.addf %67, %68 : vector<32x1xf32>
    %70 = math.rsqrt %69 : vector<32x1xf32>
    %cst_20 = arith.constant 0.000000e+00 : f32
    %71 = vector.broadcast %cst_20 : f32 to vector<32x1xf32>
    %72 = arith.subf %71, %58 : vector<32x1xf32>
    %73 = arith.mulf %72, %70 : vector<32x1xf32>
    %74 = vector.broadcast %70 : vector<32x1xf32> to vector<32x256xf32>
    %75 = arith.mulf %54, %74 : vector<32x256xf32>
    %76 = vector.broadcast %73 : vector<32x1xf32> to vector<32x256xf32>
    %77 = arith.addf %75, %76 : vector<32x256xf32>
    %cst_21 = arith.constant 0.000000e+00 : f32
    %cst_22 = arith.constant 6.000000e+00 : f32
    %78 = vector.broadcast %cst_21 : f32 to vector<32x256xf32>
    %79 = arith.maximumf %78, %77 : vector<32x256xf32>
    %80 = vector.broadcast %cst_22 : f32 to vector<32x256xf32>
    %81 = arith.minimumf %80, %79 : vector<32x256xf32>
    %82 = arith.truncf %81 : vector<32x256xf32> to vector<32x256xbf16>
    %83 = vector.extract_strided_slice %1 {offsets = [64, 0], sizes = [8, 32], strides = [1, 1]} : vector<72x33xf32> to vector<8x32xf32>
    %84 = vector.extract_strided_slice %1 {offsets = [64, 32], sizes = [8, 1], strides = [1, 1]} : vector<72x33xf32> to vector<8x1xf32>
    %85 = arith.truncf %83 : vector<8x32xf32> to vector<8x32xbf16>
    %cst_23 = arith.constant dense<0.000000e+00> : vector<8x256xf32>
    %86 = tpu.matmul %85, %82, %cst_23 {dimension_numbers = #tpu.dot_dimension_numbers<[1], [0], [0], [1], [0, 0, 1, 1], [], []>} : vector<8x32xbf16>, vector<32x256xbf16>, vector<8x256xf32> -> vector<8x256xf32>
    %87 = vector.broadcast %84 : vector<8x1xf32> to vector<8x256xf32>
    %88 = arith.addf %86, %87 : vector<8x256xf32>
    %cst_24 = arith.constant dense<0xFF800000> : vector<256xf32>
    %89 = vector.multi_reduction <maximumf>, %88, %cst_24 [0] : vector<8x256xf32> to vector<256xf32>
    %90 = vector.shape_cast %89 : vector<256xf32> to vector<1x256xf32>
    %91 = vector.broadcast %90 : vector<1x256xf32> to vector<8x256xf32>
    %92 = arith.subf %88, %91 : vector<8x256xf32>
    %93 = math.exp %92 : vector<8x256xf32>
    %cst_25 = arith.constant dense<0.000000e+00> : vector<256xf32>
    %94 = vector.multi_reduction <add>, %93, %cst_25 [0] : vector<8x256xf32> to vector<256xf32>
    %95 = vector.shape_cast %94 : vector<256xf32> to vector<1x256xf32>
    %96 = tpu.reciprocal %95 {approx = true} : vector<1x256xf32> -> vector<1x256xf32>
    %97 = vector.broadcast %96 : vector<1x256xf32> to vector<8x256xf32>
    %98 = arith.mulf %93, %97 : vector<8x256xf32>
    %cst_26 = arith.constant 9.99999974E-5 : f32
    %99 = vector.broadcast %cst_26 : f32 to vector<8x256xf32>
    %100 = arith.addf %99, %98 : vector<8x256xf32>
    %c0_27 = arith.constant 0 : index
    %c0_28 = arith.constant 0 : index
    %101 = vector.load %arg2[%c0_27, %c0_28] : memref<8x256xf32, #tpu.memory_space<vmem>>, vector<8x256xf32>
    tpu.vector_store %arg2[%c0_27, %c0_28], %100 {strides = array<i32>} : memref<8x256xf32, #tpu.memory_space<vmem>>, vector<8x256xf32>,
    return
  }
}

</mosaic_0001>

<llo_original>
// kernel: tpu_custom_call.1
$region0: #{tpu_custom_call.1}
  #allocation0 [shape = 'u32[]', space=smem, size = 0x4, offset = 0x4, fixed_abs, tag = 'smem constant byte address 0x4 - core index']
  #allocation1 [shape = 'u32[144,128]{1,0:T(1,128)}', space=vmem, size = 0x12000, scoped, tag = 'internal scratch']
  %s0 = inlined_call_operand.vmem [shape: f32[2,256], index: 0, kind: input, shape index: {}]
  %s1 = inlined_call_operand.vmem [shape: f32[72,33], index: 1, kind: input, shape index: {}]
  %s2 = inlined_call_operand.hbm [shape: f32[8,256], index: 2, kind: output, shape index: {}]
  %s3 = sld [smem:[#allocation0]]
  $region18: #{tpu_custom_call.1} parent=0
    _
  %s5 = ssub.s32 1, %s3
  %s6 = scalar_select 0, %s5, %s3
  $region1: #{tpu_custom_call.1} parent=0
    #allocation2 [shape = 'u8[8192]{0}', space=vmem, size = 0x2000, scoped, tag = 'output window, operand 0, single buffered']
    #allocation3 [shape = 's32[1]{0}', space=sflag, size = 0x4, scoped, tag = 'scoped memory for tpu_custom_call.1']
    %7 = vsyncpa [#allocation3], 0
    // Predicated region
    $region2: #{tpu_custom_call.1} parent=1 // pred_check
      _
    $region3: #{tpu_custom_call.1} parent=1 // pred_check_branch
      %9 = sbr.rel (0) target = $region5
    $region4: #{tpu_custom_call.1} parent=1 // pred_region
      _
    $region5: #{tpu_custom_call.1} parent=1 // pred_fallthru
      _
    // Predicated region
    $region6: #{tpu_custom_call.1} parent=1 // pred_check
      _
    $region7: #{tpu_custom_call.1} parent=1 // pred_check_branch
      %11 = sbr.rel (0) target = $region9
    $region8: #{tpu_custom_call.1} parent=1 // pred_region
      _
    $region9: #{tpu_custom_call.1} parent=1 // pred_fallthru
      _
    %v13 = vld [vmem:[%s0] sm:$0xf]
    %v14 = vld [vmem:[%s1] sm:$0xff]
    %v15 = vld [vmem:[%s1 + $0x8] sm:$0xff]
    %v16 = vld [vmem:[%s1 + $0x10] sm:$0xff]
    %v17 = vld [vmem:[%s1 + $0x18] sm:$0xff]
    %v18 = vld [vmem:[%s1 + $0x20] sm:$0xff]
    %v19 = vld [vmem:[%s1 + $0x28] sm:$0xff]
    %v20 = vld [vmem:[%s1 + $0x30] sm:$0xff]
    %v21 = vld [vmem:[%s1 + $0x38] sm:$0xff]
    %v22 = vld [vmem:[%s1 + $0x40] sm:$0xff]
    %v23 = vsub.f32 %v13, 8.0
    %v24 = vand.u32 2147483647, %v23
    %v25 = vadd.f32 %v24, 8.0
    %27 = vset.pattern.permute.xlu0 0
    %28 = vperm.xlu0 %27, %v14
    %v29 = vpop.permute.xlu0 %28
    %32 = vset.pattern.permute.xlu0 0
    %33 = vperm.xlu0 %32, %v15
    %v34 = vpop.permute.xlu0 %33
    %37 = vset.pattern.permute.xlu0 0
    %38 = vperm.xlu0 %37, %v16
    %v39 = vpop.permute.xlu0 %38
    %42 = vset.pattern.permute.xlu0 0
    %43 = vperm.xlu0 %42, %v17
    %v44 = vpop.permute.xlu0 %43
    %v47 = vlaneseq
    %v48 = vshrl.u32 %v47, 7
    %v49 = vsub.s32 0, %v48
    %v50 = vrot.slane %v13, %v49
    %v51 = vlaneseq
    %v52 = vshrl.u32 %v51, 7
    %v53 = vsub.s32 2, %v52
    %v54 = vrot.slane %v13, %v53
    %v57 = vlaneseq
    %v58 = vshrl.u32 %v57, 7
    %v59 = vsub.s32 0, %v58
    %v60 = vrot.slane %v50, %v59
    %v61 = vlaneseq
    %v62 = vshrl.u32 %v61, 7
    %v63 = vsub.s32 0, %v62
    %v64 = vrot.slane %v54, %v63
    %v65 = vmul.f32 %v29, %v60
    %v66 = vmul.f32 %v29, %v64
    %v67 = vmul.f32 %v34, %v60
    %v68 = vmul.f32 %v34, %v64
    %v69 = vmul.f32 %v39, %v60
    %v70 = vmul.f32 %v39, %v64
    %v71 = vmul.f32 %v44, %v60
    %v72 = vmul.f32 %v44, %v64
    %73 = vset.pattern.permute.xlu0 1
    %74 = vperm.xlu0 %73, %v14
    %v75 = vpop.permute.xlu0 %74
    %77 = vset.pattern.permute.xlu0 1
    %78 = vperm.xlu0 %77, %v15
    %v79 = vpop.permute.xlu0 %78
    %81 = vset.pattern.permute.xlu0 1
    %82 = vperm.xlu0 %81, %v16
    %v83 = vpop.permute.xlu0 %82
    %85 = vset.pattern.permute.xlu0 1
    %86 = vperm.xlu0 %85, %v17
    %v87 = vpop.permute.xlu0 %86
    %v90 = vlaneseq
    %v91 = vshrl.u32 %v90, 7
    %v92 = vsub.s32 1, %v91
    %v93 = vrot.slane %v25, %v92
    %v94 = vlaneseq
    %v95 = vshrl.u32 %v94, 7
    %v96 = vsub.s32 3, %v95
    %v97 = vrot.slane %v25, %v96
    %v100 = vlaneseq
    %v101 = vshrl.u32 %v100, 7
    %v102 = vsub.s32 1, %v101
    %v103 = vrot.slane %v93, %v102
    %v104 = vlaneseq
    %v105 = vshrl.u32 %v104, 7
    %v106 = vsub.s32 1, %v105
    %v107 = vrot.slane %v97, %v106
    %v108 = vmul.f32 %v75, %v103
    %v109 = vmul.f32 %v75, %v107
    %v110 = vmul.f32 %v79, %v103
    %v111 = vmul.f32 %v79, %v107
    %v112 = vmul.f32 %v83, %v103
    %v113 = vmul.f32 %v83, %v107
    %v114 = vmul.f32 %v87, %v103
    %v115 = vmul.f32 %v87, %v107
    %v116 = vadd.f32 %v65, %v108
    %v117 = vadd.f32 %v66, %v109
    %v118 = vadd.f32 %v67, %v110
    %v119 = vadd.f32 %v68, %v111
    %v120 = vadd.f32 %v69, %v112
    %v121 = vadd.f32 %v70, %v113
    %v122 = vadd.f32 %v71, %v114
    %v123 = vadd.f32 %v72, %v115
    %124 = vset.pattern.permute.xlu0 32
    %125 = vperm.xlu0 %124, %v14
    %v126 = vpop.permute.xlu0 %125
    %128 = vset.pattern.permute.xlu0 32
    %129 = vperm.xlu0 %128, %v15
    %v130 = vpop.permute.xlu0 %129
    %132 = vset.pattern.permute.xlu0 32
    %133 = vperm.xlu0 %132, %v16
    %v134 = vpop.permute.xlu0 %133
    %136 = vset.pattern.permute.xlu0 32
    %137 = vperm.xlu0 %136, %v17
    %v138 = vpop.permute.xlu0 %137
    %v140 = vadd.f32 %v116, %v126
    %v141 = vadd.f32 %v117, %v126
    %v142 = vadd.f32 %v118, %v130
    %v143 = vadd.f32 %v119, %v130
    %v144 = vadd.f32 %v120, %v134
    %v145 = vadd.f32 %v121, %v134
    %v146 = vadd.f32 %v122, %v138
    %v147 = vadd.f32 %v123, %v138
    %v148 = vadd.f32 %v140, %v141
    %149 = vadd.xlane.f32.xlu0 %v148
    %v150 = vpop.xlane.xlu0 %149
    %v151 = vadd.f32 %v142, %v143
    %152 = vadd.xlane.f32.xlu0 %v151
    %v153 = vpop.xlane.xlu0 %152
    %v154 = vadd.f32 %v144, %v145
    %155 = vadd.xlane.f32.xlu0 %v154
    %v156 = vpop.xlane.xlu0 %155
    %v157 = vadd.f32 %v146, %v147
    %158 = vadd.xlane.f32.xlu0 %v157
    %v159 = vpop.xlane.xlu0 %158
    %v160 = vmul.f32 %v150, 0.00390625
    %v161 = vmul.f32 %v153, 0.00390625
    %v162 = vmul.f32 %v156, 0.00390625
    %v163 = vmul.f32 %v159, 0.00390625
    %v164 = vmul.f32 %v140, %v140
    %v165 = vmul.f32 %v141, %v141
    %v166 = vmul.f32 %v142, %v142
    %v167 = vmul.f32 %v143, %v143
    %v168 = vmul.f32 %v144, %v144
    %v169 = vmul.f32 %v145, %v145
    %v170 = vmul.f32 %v146, %v146
    %v171 = vmul.f32 %v147, %v147
    %v172 = vadd.f32 %v164, %v165
    %173 = vadd.xlane.f32.xlu0 %v172
    %v174 = vpop.xlane.xlu0 %173
    %v175 = vadd.f32 %v166, %v167
    %176 = vadd.xlane.f32.xlu0 %v175
    %v177 = vpop.xlane.xlu0 %176
    %v178 = vadd.f32 %v168, %v169
    %179 = vadd.xlane.f32.xlu0 %v178
    %v180 = vpop.xlane.xlu0 %179
    %v181 = vadd.f32 %v170, %v171
    %182 = vadd.xlane.f32.xlu0 %v181
    %v183 = vpop.xlane.xlu0 %182
    %v184 = vmul.f32 %v174, 0.00390625
    %v185 = vmul.f32 %v177, 0.00390625
    %v186 = vmul.f32 %v180, 0.00390625
    %v187 = vmul.f32 %v183, 0.00390625
    %v188 = vmul.f32 %v160, %v160
    %v189 = vmul.f32 %v161, %v161
    %v190 = vmul.f32 %v162, %v162
    %v191 = vmul.f32 %v163, %v163
    %v192 = vsub.f32 %v184, %v188
    %v193 = vsub.f32 %v185, %v189
    %v194 = vsub.f32 %v186, %v190
    %v195 = vsub.f32 %v187, %v191
    %v196 = vmax.f32 %v192, 0.0
    %v197 = vmax.f32 %v193, 0.0
    %v198 = vmax.f32 %v194, 0.0
    %v199 = vmax.f32 %v195, 0.0
    %v200 = vadd.f32 %v196, 1e-05
    %v201 = vadd.f32 %v197, 1e-05
    %v202 = vadd.f32 %v198, 1e-05
    %v203 = vadd.f32 %v199, 1e-05
    %v204 = vrsqrt.pop %v200
    %v205 = vrsqrt.pop %v201
    %v206 = vrsqrt.pop %v202
    %v207 = vrsqrt.pop %v203
    %v208 = vsub.f32 0.0, %v160
    %v209 = vsub.f32 0.0, %v161
    %v210 = vsub.f32 0.0, %v162
    %v211 = vsub.f32 0.0, %v163
    %v212 = vmul.f32 %v208, %v204
    %v213 = vmul.f32 %v209, %v205
    %v214 = vmul.f32 %v210, %v206
    %v215 = vmul.f32 %v211, %v207
    %v216 = vmul.f32 %v140, %v204
    %v217 = vmul.f32 %v141, %v204
    %v218 = vmul.f32 %v142, %v205
    %v219 = vmul.f32 %v143, %v205
    %v220 = vmul.f32 %v144, %v206
    %v221 = vmul.f32 %v145, %v206
    %v222 = vmul.f32 %v146, %v207
    %v223 = vmul.f32 %v147, %v207
    %v224 = vadd.f32 %v216, %v212
    %v225 = vadd.f32 %v217, %v212
    %v226 = vadd.f32 %v218, %v213
    %v227 = vadd.f32 %v219, %v213
    %v228 = vadd.f32 %v220, %v214
    %v229 = vadd.f32 %v221, %v214
    %v230 = vadd.f32 %v222, %v215
    %v231 = vadd.f32 %v223, %v215
    %v232 = vmax.f32 %v224, 0.0
    %v233 = vmax.f32 %v225, 0.0
    %v234 = vmax.f32 %v226, 0.0
    %v235 = vmax.f32 %v227, 0.0
    %v236 = vmax.f32 %v228, 0.0
    %v237 = vmax.f32 %v229, 0.0
    %v238 = vmax.f32 %v230, 0.0
    %v239 = vmax.f32 %v231, 0.0
    %v240 = vmin.f32 %v232, 6.0
    %v241 = vmin.f32 %v233, 6.0
    %v242 = vmin.f32 %v234, 6.0
    %v243 = vmin.f32 %v235, 6.0
    %v244 = vmin.f32 %v236, 6.0
    %v245 = vmin.f32 %v237, 6.0
    %v246 = vmin.f32 %v238, 6.0
    %v247 = vmin.f32 %v239, 6.0
    %v248 = vpack.c.bf16 %v242, %v240
    %v249 = vpack.c.bf16 %v243, %v241
    %v250 = vpack.c.bf16 %v246, %v244
    %v251 = vpack.c.bf16 %v247, %v245
    %v252 = vpack.c.bf16 %v19, %v18
    %v253 = vpack.c.bf16 %v21, %v20
    %255 = vset.pattern.permute.xlu0 32
    %256 = vperm.xlu0 %255, %v18
    %v257 = vpop.permute.xlu0 %256
    %260 = vset.pattern.permute.xlu0 32
    %261 = vperm.xlu0 %260, %v19
    %v262 = vpop.permute.xlu0 %261
    %265 = vset.pattern.permute.xlu0 32
    %266 = vperm.xlu0 %265, %v20
    %v267 = vpop.permute.xlu0 %266
    %270 = vset.pattern.permute.xlu0 32
    %271 = vperm.xlu0 %270, %v21
    %v272 = vpop.permute.xlu0 %271
    %vm274 = vcmask 261120
    %v276 = vsel %vm274, %v252, 0
    %v279 = vsel %vm274, %v253, 0
    %281 = vmatprep.subr.bf16.mxu0 %v249
    %282 = vmatpush1.bf16.msra.mxu0 %v248
    %283 = vmatprep.subr.bf16.mxu0 %v251
    %284 = vmatpush1.bf16.msra.mxu0 %v250
    %285 = vmatprep.subr.bf16.mxu0 0
    %286 = vmatpush1.bf16.msra.mxu0 0
    %287 = vmatprep.subr.bf16.mxu0 0
    %288 = vmatpush1.bf16.msra.mxu0 0
    %289 = vmatprep.subr.bf16.mxu0 0
    %290 = vmatpush1.bf16.msra.mxu0 0
    %291 = vmatprep.subr.bf16.mxu0 0
    %292 = vmatpush1.bf16.msra.mxu0 0
    %293 = vmatprep.subr.bf16.mxu0 0
    %294 = vmatpush1.bf16.msra.mxu0 0
    %295 = vmatprep.subr.bf16.mxu0 0
    %296 = vmatpush1.bf16.msra.mxu0 0
    %297 = vmatprep.subr.bf16.mxu0 0
    %298 = vmatpush1.bf16.msra.mxu0 0
    %299 = vmatprep.subr.bf16.mxu0 0
    %300 = vmatpush1.bf16.msra.mxu0 0
    %301 = vmatprep.subr.bf16.mxu0 0
    %302 = vmatpush1.bf16.msra.mxu0 0
    %303 = vmatprep.subr.bf16.mxu0 0
    %304 = vmatpush1.bf16.msra.mxu0 0
    %305 = vmatprep.subr.bf16.mxu0 0
    %306 = vmatpush1.bf16.msra.mxu0 0
    %307 = vmatprep.subr.bf16.mxu0 0
    %308 = vmatpush1.bf16.msra.mxu0 0
    %309 = vmatprep.subr.bf16.mxu0 0
    %310 = vmatpush1.bf16.msra.mxu0 0
    %311 = vmatprep.subr.bf16.mxu0 0
    %312 = vmatpush1.bf16.msra.mxu0 0
    %313 = vmatprep.mubr.bf16.mxu0 0
    %314 = vmatmul.mubr.bf16.gmra.mrb[0].mxu0 %v276
    %v315 = vpop.f32.mrb[0].mxu0
    %v316 = vadd.f32 %v257, %v315
    %v317 = vpop.f32.mrb[0].mxu0
    %v318 = vadd.f32 %v257, %v317
    %v319 = vpop.f32.mrb[0].mxu0
    %v320 = vadd.f32 %v262, %v319
    %v321 = vpop.f32.mrb[0].mxu0
    %v322 = vadd.f32 %v262, %v321
    %323 = vmatprep.mubr.bf16.mxu0 0
    %324 = vmatmul.mubr.bf16.gmra.mrb[0].mxu0 %v279
    %v325 = vpop.f32.mrb[0].mxu0
    %v326 = vadd.f32 %v267, %v325
    %v327 = vpop.f32.mrb[0].mxu0
    %v328 = vadd.f32 %v267, %v327
    %v329 = vpop.f32.mrb[0].mxu0
    %v330 = vadd.f32 %v272, %v329
    %v331 = vpop.f32.mrb[0].mxu0
    %v332 = vadd.f32 %v272, %v331
    %333 = vdwg.mxu0
    %v334 = vadd.f32 %v316, %v318
    %335 = vadd.xlane.f32.xlu0 %v334
    %v336 = vpop.xlane.xlu0 %335
    %v337 = vadd.f32 %v320, %v322
    %338 = vadd.xlane.f32.xlu0 %v337
    %v339 = vpop.xlane.xlu0 %338
    %v340 = vadd.f32 %v326, %v328
    %341 = vadd.xlane.f32.xlu0 %v340
    %v342 = vpop.xlane.xlu0 %341
    %v343 = vadd.f32 %v330, %v332
    %344 = vadd.xlane.f32.xlu0 %v343
    %v345 = vpop.xlane.xlu0 %344
    %v346 = vmul.f32 %v336, 0.00390625
    %v347 = vmul.f32 %v339, 0.00390625
    %v348 = vmul.f32 %v342, 0.00390625
    %v349 = vmul.f32 %v345, 0.00390625
    %v350 = vmul.f32 %v316, %v316
    %v351 = vmul.f32 %v318, %v318
    %v352 = vmul.f32 %v320, %v320
    %v353 = vmul.f32 %v322, %v322
    %v354 = vmul.f32 %v326, %v326
    %v355 = vmul.f32 %v328, %v328
    %v356 = vmul.f32 %v330, %v330
    %v357 = vmul.f32 %v332, %v332
    %v358 = vadd.f32 %v350, %v351
    %359 = vadd.xlane.f32.xlu0 %v358
    %v360 = vpop.xlane.xlu0 %359
    %v361 = vadd.f32 %v352, %v353
    %362 = vadd.xlane.f32.xlu0 %v361
    %v363 = vpop.xlane.xlu0 %362
    %v364 = vadd.f32 %v354, %v355
    %365 = vadd.xlane.f32.xlu0 %v364
    %v366 = vpop.xlane.xlu0 %365
    %v367 = vadd.f32 %v356, %v357
    %368 = vadd.xlane.f32.xlu0 %v367
    %v369 = vpop.xlane.xlu0 %368
    %v370 = vmul.f32 %v360, 0.00390625
    %v371 = vmul.f32 %v363, 0.00390625
    %v372 = vmul.f32 %v366, 0.00390625
    %v373 = vmul.f32 %v369, 0.00390625
    %v374 = vmul.f32 %v346, %v346
    %v375 = vmul.f32 %v347, %v347
    %v376 = vmul.f32 %v348, %v348
    %v377 = vmul.f32 %v349, %v349
    %v378 = vsub.f32 %v370, %v374
    %v379 = vsub.f32 %v371, %v375
    %v380 = vsub.f32 %v372, %v376
    %v381 = vsub.f32 %v373, %v377
    %v382 = vmax.f32 %v378, 0.0
    %v383 = vmax.f32 %v379, 0.0
    %v384 = vmax.f32 %v380, 0.0
    %v385 = vmax.f32 %v381, 0.0
    %v386 = vadd.f32 %v382, 1e-05
    %v387 = vadd.f32 %v383, 1e-05
    %v388 = vadd.f32 %v384, 1e-05
    %v389 = vadd.f32 %v385, 1e-05
    %v390 = vrsqrt.pop %v386
    %v391 = vrsqrt.pop %v387
    %v392 = vrsqrt.pop %v388
    %v393 = vrsqrt.pop %v389
    %v394 = vsub.f32 0.0, %v346
    %v395 = vsub.f32 0.0, %v347
    %v396 = vsub.f32 0.0, %v348
    %v397 = vsub.f32 0.0, %v349
    %v398 = vmul.f32 %v394, %v390
    %v399 = vmul.f32 %v395, %v391
    %v400 = vmul.f32 %v396, %v392
    %v401 = vmul.f32 %v397, %v393
    %v402 = vmul.f32 %v316, %v390
    %v403 = vmul.f32 %v318, %v390
    %v404 = vmul.f32 %v320, %v391
    %v405 = vmul.f32 %v322, %v391
    %v406 = vmul.f32 %v326, %v392
    %v407 = vmul.f32 %v328, %v392
    %v408 = vmul.f32 %v330, %v393
    %v409 = vmul.f32 %v332, %v393
    %v410 = vadd.f32 %v402, %v398
    %v411 = vadd.f32 %v403, %v398
    %v412 = vadd.f32 %v404, %v399
    %v413 = vadd.f32 %v405, %v399
    %v414 = vadd.f32 %v406, %v400
    %v415 = vadd.f32 %v407, %v400
    %v416 = vadd.f32 %v408, %v401
    %v417 = vadd.f32 %v409, %v401
    %v418 = vmax.f32 %v410, 0.0
    %v419 = vmax.f32 %v411, 0.0
    %v420 = vmax.f32 %v412, 0.0
    %v421 = vmax.f32 %v413, 0.0
    %v422 = vmax.f32 %v414, 0.0
    %v423 = vmax.f32 %v415, 0.0
    %v424 = vmax.f32 %v416, 0.0
    %v425 = vmax.f32 %v417, 0.0
    %v426 = vmin.f32 %v418, 6.0
    %v427 = vmin.f32 %v419, 6.0
    %v428 = vmin.f32 %v420, 6.0
    %v429 = vmin.f32 %v421, 6.0
    %v430 = vmin.f32 %v422, 6.0
    %v431 = vmin.f32 %v423, 6.0
    %v432 = vmin.f32 %v424, 6.0
    %v433 = vmin.f32 %v425, 6.0
    %v434 = vpack.c.bf16 %v428, %v426
    %v435 = vpack.c.bf16 %v429, %v427
    %v436 = vpack.c.bf16 %v432, %v430
    %v437 = vpack.c.bf16 %v433, %v431
    %v438 = vpack.c.bf16 %v22, %v22
    %440 = vset.pattern.permute.xlu0 32
    %441 = vperm.xlu0 %440, %v22
    %v442 = vpop.permute.xlu0 %441
    %v445 = vsel %vm274, %v438, 0
    %447 = vmatprep.subr.bf16.mxu0 %v435
    %448 = vmatpush1.bf16.msra.mxu0 %v434
    %449 = vmatprep.subr.bf16.mxu0 %v437
    %450 = vmatpush1.bf16.msra.mxu0 %v436
    %451 = vmatprep.subr.bf16.mxu0 0
    %452 = vmatpush1.bf16.msra.mxu0 0
    %453 = vmatprep.subr.bf16.mxu0 0
    %454 = vmatpush1.bf16.msra.mxu0 0
    %455 = vmatprep.subr.bf16.mxu0 0
    %456 = vmatpush1.bf16.msra.mxu0 0
    %457 = vmatprep.subr.bf16.mxu0 0
    %458 = vmatpush1.bf16.msra.mxu0 0
    %459 = vmatprep.subr.bf16.mxu0 0
    %460 = vmatpush1.bf16.msra.mxu0 0
    %461 = vmatprep.subr.bf16.mxu0 0
    %462 = vmatpush1.bf16.msra.mxu0 0
    %463 = vmatprep.subr.bf16.mxu0 0
    %464 = vmatpush1.bf16.msra.mxu0 0
    %465 = vmatprep.subr.bf16.mxu0 0
    %466 = vmatpush1.bf16.msra.mxu0 0
    %467 = vmatprep.subr.bf16.mxu0 0
    %468 = vmatpush1.bf16.msra.mxu0 0
    %469 = vmatprep.subr.bf16.mxu0 0
    %470 = vmatpush1.bf16.msra.mxu0 0
    %471 = vmatprep.subr.bf16.mxu0 0
    %472 = vmatpush1.bf16.msra.mxu0 0
    %473 = vmatprep.subr.bf16.mxu0 0
    %474 = vmatpush1.bf16.msra.mxu0 0
    %475 = vmatprep.subr.bf16.mxu0 0
    %476 = vmatpush1.bf16.msra.mxu0 0
    %477 = vmatprep.subr.bf16.mxu0 0
    %478 = vmatpush1.bf16.msra.mxu0 0
    %479 = vmatprep.mubr.bf16.mxu0 0
    %480 = vmatmul.mubr.bf16.gmra.mrb[0].mxu0 %v445
    %v481 = vpop.f32.mrb[0].mxu0
    %v482 = vadd.f32 %v442, %v481
    %v483 = vpop.f32.mrb[0].mxu0
    %v484 = vadd.f32 %v442, %v483
    %v485 = vpop.f32.mrb[0].mxu0
    %v486 = vpop.f32.mrb[0].mxu0
    %487 = vdwg.mxu0
    %v488 = vrot.slane %v482, 4
    %v489 = vmax.f32 %v482, %v488
    %v490 = vrot.slane %v489, 2
    %v491 = vmax.f32 %v489, %v490
    %v492 = vrot.slane %v491, 1
    %v493 = vmax.f32 %v491, %v492
    %v494 = vrot.slane %v484, 4
    %v495 = vmax.f32 %v484, %v494
    %v496 = vrot.slane %v495, 2
    %v497 = vmax.f32 %v495, %v496
    %v498 = vrot.slane %v497, 1
    %v499 = vmax.f32 %v497, %v498
    %v500 = vsub.f32 %v482, %v493
    %v501 = vsub.f32 %v484, %v499
    %v502 = vmul.f32 %v500, 1.442695
    %v503 = vpow.pop %v502
    %v504 = vmul.f32 %v501, 1.442695
    %v505 = vpow.pop %v504
    %v506 = vrot.slane %v503, 4
    %v507 = vadd.f32 %v503, %v506
    %v508 = vrot.slane %v507, 2
    %v509 = vadd.f32 %v507, %v508
    %v510 = vrot.slane %v509, 1
    %v511 = vadd.f32 %v509, %v510
    %v512 = vrot.slane %v505, 4
    %v513 = vadd.f32 %v505, %v512
    %v514 = vrot.slane %v513, 2
    %v515 = vadd.f32 %v513, %v514
    %v516 = vrot.slane %v515, 1
    %v517 = vadd.f32 %v515, %v516
    %v518 = vrcp.pop %v511
    %v519 = vrcp.pop %v517
    %v520 = vmul.f32 %v503, %v518
    %v521 = vmul.f32 %v505, %v519
    %v522 = vadd.f32 %v520, 0.0001
    %v523 = vadd.f32 %v521, 0.0001
    %524 = vst [vmem:[#allocation2] sm:$0xff] %v522
    %525 = vst [vmem:[#allocation2 + $0x8] sm:$0xff] %v523
    // Predicated region
    $region10: #{tpu_custom_call.1} parent=1 // pred_check
      _
    $region11: #{tpu_custom_call.1} parent=1 // pred_check_branch
      %527 = sbr.rel (0) target = $region13
    $region12: #{tpu_custom_call.1} parent=1 // pred_region
      %s529 = ssub.s32 256, 256
      %530 = vsyncadd [#allocation3], %s529
      %s532 = sshll.u32 [#allocation2], 4
      %s533 = int_to_ptr.vmem [resolvable:$true] %s532
      %535 = dma.vmem_to_hbm [thread:$0]  %s533, 256, %s2, [#allocation3]
    $region13: #{tpu_custom_call.1} parent=1 // pred_fallthru
      _
    // Predicated region
    $region14: #{tpu_custom_call.1} parent=1 // pred_check
      _
    $region15: #{tpu_custom_call.1} parent=1 // pred_check_branch
      %537 = sbr.rel (0) target = $region17
    $region16: #{tpu_custom_call.1} parent=1 // pred_region
      %538 = dma.done [#allocation3], 256
    $region17: #{tpu_custom_call.1} parent=1 // pred_fallthru
      _
    %539 = vsyncpa [#allocation3], 1

</llo_original>
